<compile_context>
chip_gen: v6e
topology: v6e:2x2x1
jax: 0.10.0
libtpu: 0.0.40
codegen_flags: <defaults>
</compile_context>

<pallas_src>
import math

import jax
import jax.numpy as jnp
from jax.experimental import pallas as pl
from jax.experimental.pallas import tpu as pltpu


def _layerscale_kernel(x_ref, g_ref, o_ref):
    # x_ref / o_ref: (TM, TN) tiles; g_ref: (1, TN) f32 gamma row, broadcast over rows.
    o_ref[...] = (x_ref[...].astype(jnp.float32) * g_ref[...]).astype(o_ref.dtype)


def _sublane_multiple(dtype) -> int:
    """Row-tile multiple so sub-32-bit dtypes pack cleanly along sublanes."""
    itemsize = jnp.dtype(dtype).itemsize
    if itemsize >= 4:
        return 8
    if itemsize == 2:
        return 16
    return 32


def _round_up(x: int, m: int) -> int:
    return ((x + m - 1) // m) * m


def _cdiv(a: int, b: int) -> int:
    return -(-a // b)


def _vmem_capacity_bytes() -> int:
    try:
        return int(pltpu.get_tpu_info().vmem_capacity_bytes)
    except Exception:
        # Conservative default: v7x per-TC VMEM (64 MiB). Safe on v5e/v6e too.
        return 64 * 1024 * 1024


def layer_scale(
    x: jax.Array,
    gamma: jax.Array,
    *,
    block_bytes: int | None = None,       # per-block byte budget; None -> VMEM-derived
    lane_target: int = 1024,              # preferred lane width when folding a small D
    min_pallas_bytes: int = 1 * 1024 * 1024,  # below this, plain XLA is strictly faster
    force_pallas: bool = False,           # testing hook: always take the pallas path
) -> jax.Array:
    """LayerScale forward: x * gamma, gamma broadcast along the last axis.

    x: (..., D); gamma: (D,). Returns same shape/dtype as x.
    """
    orig_shape = x.shape
    D = orig_shape[-1]
    assert gamma.shape == (D,), f"gamma must have shape ({D},), got {gamma.shape}"

    dtype = x.dtype
    itemsize = jnp.dtype(dtype).itemsize
    sub = _sublane_multiple(dtype)
    total = math.prod(orig_shape)
    total_bytes = total * itemsize

    # Keep gamma in f32 for the multiply (matches f32-parameter PyTorch semantics even
    # for low-precision activations); cast the result back to x's dtype.
    g32 = gamma.astype(jnp.float32)

    # ---- small-tensor fast path -------------------------------------------------------
    if not force_pallas and total_bytes < min_pallas_bytes:
        return (x.astype(jnp.float32) * g32).astype(dtype)

    # ---- generation-aware byte budgets ------------------------------------------------
    vmem_cap = _vmem_capacity_bytes()
    if block_bytes is None:
        # ~4 MiB blocks on 64 MiB-VMEM v7x, ~8 MiB on 128 MiB-VMEM v5e/v6e.
        block_bytes = max(4 * 1024 * 1024, min(16 * 1024 * 1024, vmem_cap // 16))
    # 2x double-buffered input + 2x output + gamma + compiler scratch slack.
    vmem_limit = min((vmem_cap * 3) // 4, 4 * block_bytes + 4 * 1024 * 1024)
    vmem_limit = max(vmem_limit, 20 * 1024 * 1024)

    # ---- choose a copy-free 2-D layout (rows, W) --------------------------------------
    if D % 128 == 0:
        # Already lane-dense: natural (rows, D) layout, full-lane vst.
        W = D
        x2 = x.reshape(-1, W)
        g_row = g32.reshape(1, W)
    else:
        lcm = (D * 128) // math.gcd(D, 128)
        if total % lcm == 0:
            # Fold channels into the lane axis (pure reshape, zero extra HBM traffic):
            # lane width = lcm(D, 128), widened only while it still divides the element
            # count — never pad.
            W = lcm
            while W * 2 <= lane_target and total % (W * 2) == 0:
                W *= 2
            x2 = x.reshape(-1, W)
            g_row = jnp.tile(g32, W // D).reshape(1, W)
        else:
            # Copy-free fallback: full-last-dim blocks (< 128 lanes -> masked vst.msk),
            # still strictly cheaper than a pad + slice round trip through HBM.
            W = D
            if sub * W * itemsize > block_bytes:
                # Ragged lane dim can't be column-tiled and one sublane stripe already
                # blows the VMEM budget — plain XLA is the safe, still-2-pass answer.
                return (x.astype(jnp.float32) * g32).astype(dtype)
            x2 = x.reshape(-1, W)
            g_row = g32.reshape(1, W)

    M = x2.shape[0]
    row_bytes = W * itemsize

    # ---- tile selection ----------------------------------------------------------------
    if sub * row_bytes > block_bytes and W % 128 == 0:
        # Very wide lane axis: tile columns too so double-buffering stays alive.
        tn = max(512, (block_bytes // (sub * itemsize)) // 128 * 128)
        tn = min(tn, W)
        tm = sub
    else:
        tn = W
        rows_budget = max(sub, (block_bytes // row_bytes) // sub * sub)
        # Keep >= 2 row blocks on non-trivial tensors so v7x megacore can shard the grid.
        if M * row_bytes > 2 * 1024 * 1024:
            rows_budget = min(rows_budget, max(sub, _round_up(_cdiv(M, 2), sub)))
        tm = min(rows_budget, _round_up(M, sub))

    grid_m = _cdiv(M, tm)

    if tn == W:
        grid = (grid_m,)
        in_specs = [
            pl.BlockSpec((tm, W), lambda i: (i, 0)),
            pl.BlockSpec((1, W), lambda i: (0, 0)),   # gamma row: resident, DMA'd once
        ]
        out_spec = pl.BlockSpec((tm, W), lambda i: (i, 0))
        dims = ("parallel",)
    else:
        grid = (grid_m, _cdiv(W, tn))
        in_specs = [
            pl.BlockSpec((tm, tn), lambda i, j: (i, j)),
            pl.BlockSpec((1, tn), lambda i, j: (0, j)),
        ]
        out_spec = pl.BlockSpec((tm, tn), lambda i, j: (i, j))
        dims = ("parallel", "parallel")

    out = pl.pallas_call(
        _layerscale_kernel,
        out_shape=jax.ShapeDtypeStruct((M, W), dtype),
        grid_spec=pltpu.PrefetchScalarGridSpec(
            num_scalar_prefetch=0,
            grid=grid,
            in_specs=in_specs,
            out_specs=out_spec,
        ),
        compiler_params=pltpu.CompilerParams(
            dimension_semantics=dims,
            vmem_limit_bytes=int(vmem_limit),
        ),
    )(x2, g_row)

    return out.reshape(orig_shape)


if __name__ == "__main__":
    key = jax.random.PRNGKey(0)
    init_values = 1e-05

    def check(x, gamma, **kw):
        y = jax.block_until_ready(layer_scale(x, gamma, **kw))
        y_ref = x * gamma
        assert y.shape == x.shape and y.dtype == x.dtype
        assert jnp.allclose(y, y_ref, rtol=1e-6, atol=1e-6), "mismatch vs reference"

    # 1) Small transformer-style tensor (batch, seq, hidden) — default path (XLA fast path).
    B, N, D = 2, 8, 32
    x_small = jax.random.normal(key, (B, N, D), dtype=jnp.float32)
    gamma_small = init_values * jnp.ones((D,), dtype=jnp.float32)  # nn.Parameter(init*ones(dim))
    check(x_small, gamma_small)

    # 2) Same tensor, forced through the Pallas kernel (lane-folding path, D % 128 != 0).
    check(x_small, gamma_small, force_pallas=True)

    # 3) Lane-dense path (D % 128 == 0), forced through the Pallas kernel.
    D2 = 128
    x_dense = jax.random.normal(jax.random.PRNGKey(1), (2, 16, D2), dtype=jnp.float32)
    gamma_dense = init_values * jnp.ones((D2,), dtype=jnp.float32)
    check(x_dense, gamma_dense, force_pallas=True)

    # 4) Ragged fallback path (total % lcm(D,128) != 0) — full-last-dim blocks, no padding.
    D3 = 7
    x_odd = jax.random.normal(jax.random.PRNGKey(2), (3, 5, D3), dtype=jnp.float32)
    gamma_odd = init_values * jnp.ones((D3,), dtype=jnp.float32)
    check(x_odd, gamma_odd, force_pallas=True)

    print("KERNEL_OK")
</pallas_src>

<mosaic_0001>
module attributes {stable_mosaic.version = 11 : i64} {
  func.func @_layerscale_kernel(%arg0: i32, %arg1: memref<8x512xf32, #tpu.memory_space<vmem>>, %arg2: memref<1x512xf32, #tpu.memory_space<vmem>>, %arg3: memref<8x512xf32, #tpu.memory_space<vmem>>) attributes {dimension_semantics = [#tpu.dimension_semantics<parallel>], iteration_bounds = array<i64: 1>, scalar_prefetch = 0 : i64, scratch_operands = 0 : i64, tpu.core_type = #tpu.core_type<tc>, window_params = [{transform_indices = @transform_0, window_bounds = array<i64: 8, 512>}, {pipeline_mode = #tpu.pipeline_mode<synchronous>, transform_indices = @transform_1, window_bounds = array<i64: 1, 512>}, {transform_indices = @transform_2, window_bounds = array<i64: 8, 512>}]} {
    %c0 = arith.constant 0 : index
    %c0_0 = arith.constant 0 : index
    %0 = vector.load %arg1[%c0, %c0_0] : memref<8x512xf32, #tpu.memory_space<vmem>>, vector<8x512xf32>
    %c0_1 = arith.constant 0 : index
    %c0_2 = arith.constant 0 : index
    %1 = vector.load %arg2[%c0_1, %c0_2] : memref<1x512xf32, #tpu.memory_space<vmem>>, vector<1x512xf32>
    %2 = vector.broadcast %1 : vector<1x512xf32> to vector<8x512xf32>
    %3 = arith.mulf %0, %2 : vector<8x512xf32>
    %c0_3 = arith.constant 0 : index
    %c0_4 = arith.constant 0 : index
    %4 = vector.load %arg3[%c0_3, %c0_4] : memref<8x512xf32, #tpu.memory_space<vmem>>, vector<8x512xf32>
    tpu.vector_store %arg3[%c0_3, %c0_4], %3 {strides = array<i32>} : memref<8x512xf32, #tpu.memory_space<vmem>>, vector<8x512xf32>,
    return
  }
  func.func @transform_0(%arg0: i32) -> (i32, i32) {
    %c0_i32 = arith.constant 0 : i32
    %c0_i32_0 = arith.constant 0 : i32
    return %arg0, %c0_i32 : i32, i32
  }
  func.func @transform_1(%arg0: i32) -> (i32, i32) {
    %c0_i32 = arith.constant 0 : i32
    %c0_i32_0 = arith.constant 0 : i32
    %c0_i32_1 = arith.constant 0 : i32
    return %c0_i32, %c0_i32_0 : i32, i32
  }
  func.func @transform_2(%arg0: i32) -> (i32, i32) {
    %c0_i32 = arith.constant 0 : i32
    %c0_i32_0 = arith.constant 0 : i32
    return %arg0, %c0_i32 : i32, i32
  }
}

</mosaic_0001>

<llo_original>
// kernel: tpu_custom_call.1
$region0: #{tpu_custom_call.1}
  #allocation0 [shape = 'u32[]', space=smem, size = 0x4, offset = 0x4, fixed_abs, tag = 'smem constant byte address 0x4 - core index']
  #allocation1 [shape = 'u32[144,128]{1,0:T(1,128)}', space=vmem, size = 0x12000, scoped, tag = 'internal scratch']
  %s0 = inlined_call_operand.hbm [shape: f32[1,512], index: 0, kind: input, shape index: {}]
  %s1 = inlined_call_operand.hbm [shape: f32[1,512], index: 1, kind: input, shape index: {}]
  %s2 = inlined_call_operand.hbm [shape: f32[1,512], index: 2, kind: output, shape index: {}]
  %s3 = sld [smem:[#allocation0]]
  $region26: #{tpu_custom_call.1} parent=0
    _
  %s5 = ssub.s32 1, %s3
  %s6 = scalar_select 0, %s5, %s3
  $region1: #{tpu_custom_call.1} parent=0
    #allocation2 [shape = 'u8[16384]{0}', space=vmem, size = 0x4000, scoped, tag = 'input window, operand 0, single buffered']
    #allocation3 [shape = 's32[1]{0}', space=sflag, size = 0x4, scoped, tag = 'scoped memory for tpu_custom_call.1']
    #allocation4 [shape = 's32[1]{0}', space=sflag, size = 0x4, scoped, tag = 'scoped memory for tpu_custom_call.1']
    #allocation5 [shape = 'u8[2048]{0}', space=vmem, size = 0x800, scoped, tag = 'input window, operand 1, single buffered']
    #allocation6 [shape = 's32[1]{0}', space=sflag, size = 0x4, scoped, tag = 'scoped memory for tpu_custom_call.1']
    #allocation7 [shape = 'u8[16384]{0}', space=vmem, size = 0x4000, scoped, tag = 'output window, operand 0, single buffered']
    %7 = vsyncpa [#allocation3], 0
    %8 = vsyncpa [#allocation6], 0
    %9 = vsyncpa [#allocation4], 0
    // Predicated region
    $region2: #{tpu_custom_call.1} parent=1 // pred_check
      _
    $region3: #{tpu_custom_call.1} parent=1 // pred_check_branch
      %11 = sbr.rel (0) target = $region5
    $region4: #{tpu_custom_call.1} parent=1 // pred_region
      %s13 = ssub.s32 512, 64
      %14 = vsyncadd [#allocation3], %s13
      %s15 = sshll.u32 [#allocation2], 4
      %s16 = int_to_ptr.vmem [resolvable:$true] %s15
      %21 = dma.hbm_to_vmem [thread:$0]  %s0, 64, %s16, [#allocation3], 64, 64, 4
    $region5: #{tpu_custom_call.1} parent=1 // pred_fallthru
      _
    // Predicated region
    $region6: #{tpu_custom_call.1} parent=1 // pred_check
      _
    $region7: #{tpu_custom_call.1} parent=1 // pred_check_branch
      %23 = sbr.rel (0) target = $region9
    $region8: #{tpu_custom_call.1} parent=1 // pred_region
      %s25 = ssub.s32 64, 64
      %26 = vsyncadd [#allocation6], %s25
      %s28 = sshll.u32 [#allocation5], 4
      %s29 = int_to_ptr.vmem [resolvable:$true] %s28
      %31 = dma.hbm_to_vmem [thread:$0]  %s1, 64, %s29, [#allocation6]
    $region9: #{tpu_custom_call.1} parent=1 // pred_fallthru
      _
    // Predicated region
    $region10: #{tpu_custom_call.1} parent=1 // pred_check
      _
    $region11: #{tpu_custom_call.1} parent=1 // pred_check_branch
      %33 = sbr.rel (0) target = $region13
    $region12: #{tpu_custom_call.1} parent=1 // pred_region
      %34 = dma.done [#allocation3], 512
    $region13: #{tpu_custom_call.1} parent=1 // pred_fallthru
      _
    // Predicated region
    $region14: #{tpu_custom_call.1} parent=1 // pred_check
      _
    $region15: #{tpu_custom_call.1} parent=1 // pred_check_branch
      %36 = sbr.rel (0) target = $region17
    $region16: #{tpu_custom_call.1} parent=1 // pred_region
      %37 = dma.done [#allocation6], 64
    $region17: #{tpu_custom_call.1} parent=1 // pred_fallthru
      _
    %v38 = vld [vmem:[#allocation2] sm:$0xf]
    %v39 = vld [vmem:[#allocation2 + $0x4] sm:$0xf]
    %v40 = vld [vmem:[#allocation2 + $0x8] sm:$0xf]
    %v41 = vld [vmem:[#allocation2 + $0xc] sm:$0xf]
    %v42 = vld [vmem:[#allocation2 + $0x10] sm:$0xf]
    %v43 = vld [vmem:[#allocation2 + $0x14] sm:$0xf]
    %v44 = vld [vmem:[#allocation2 + $0x18] sm:$0xf]
    %v45 = vld [vmem:[#allocation2 + $0x1c] sm:$0xf]
    %v46 = vld [vmem:[#allocation5] sm:$0xf]
    %v48 = vlaneseq
    %v49 = vshrl.u32 %v48, 7
    %v50 = vsub.s32 0, %v49
    %v51 = vrot.slane %v46, %v50
    %v52 = vlaneseq
    %v53 = vshrl.u32 %v52, 7
    %v54 = vsub.s32 1, %v53
    %v55 = vrot.slane %v46, %v54
    %v56 = vlaneseq
    %v57 = vshrl.u32 %v56, 7
    %v58 = vsub.s32 2, %v57
    %v59 = vrot.slane %v46, %v58
    %v60 = vlaneseq
    %v61 = vshrl.u32 %v60, 7
    %v62 = vsub.s32 3, %v61
    %v63 = vrot.slane %v46, %v62
    %v64 = vcombine.low %v51, %v55
    %v65 = vcombine.high %v51, %v55
    %v66 = vcombine.low %v59, %v63
    %v67 = vcombine.high %v59, %v63
    %v69 = vunpack.c.l.s4 1966171168
    %v70 = vunpack.c.0.s8 %v69
    %v71 = vlaneseq
    %v72 = vshrl.u32 %v71, 7
    %v73 = vsub.s32 %v70, %v72
    %v74 = vrot.slane %v64, %v73
    %v76 = vunpack.c.l.s4 1966171168
    %v77 = vunpack.c.0.s8 %v76
    %v78 = vlaneseq
    %v79 = vshrl.u32 %v78, 7
    %v80 = vsub.s32 %v77, %v79
    %v81 = vrot.slane %v65, %v80
    %v83 = vunpack.c.l.s4 1966171168
    %v84 = vunpack.c.0.s8 %v83
    %v85 = vlaneseq
    %v86 = vshrl.u32 %v85, 7
    %v87 = vsub.s32 %v84, %v86
    %v88 = vrot.slane %v66, %v87
    %v90 = vunpack.c.l.s4 1966171168
    %v91 = vunpack.c.0.s8 %v90
    %v92 = vlaneseq
    %v93 = vshrl.u32 %v92, 7
    %v94 = vsub.s32 %v91, %v93
    %v95 = vrot.slane %v67, %v94
    %v96 = vcombine.low %v74, %v88
    %v97 = vcombine.high %v74, %v88
    %v98 = vcombine.low %v81, %v95
    %v99 = vcombine.high %v81, %v95
    %v101 = vunpack.c.l.s4 1966171168
    %v102 = vunpack.c.0.s8 %v101
    %v103 = vlaneseq
    %v104 = vshrl.u32 %v103, 7
    %v105 = vsub.s32 %v102, %v104
    %v106 = vrot.slane %v96, %v105
    %v108 = vunpack.c.l.s4 1966171168
    %v109 = vunpack.c.0.s8 %v108
    %v110 = vlaneseq
    %v111 = vshrl.u32 %v110, 7
    %v112 = vsub.s32 %v109, %v111
    %v113 = vrot.slane %v98, %v112
    %v115 = vunpack.c.l.s4 1966171168
    %v116 = vunpack.c.0.s8 %v115
    %v117 = vlaneseq
    %v118 = vshrl.u32 %v117, 7
    %v119 = vsub.s32 %v116, %v118
    %v120 = vrot.slane %v97, %v119
    %v122 = vunpack.c.l.s4 1966171168
    %v123 = vunpack.c.0.s8 %v122
    %v124 = vlaneseq
    %v125 = vshrl.u32 %v124, 7
    %v126 = vsub.s32 %v123, %v125
    %v127 = vrot.slane %v99, %v126
    %v128 = vcombine.high %v106, %v106
    %v129 = vcombine.high %v113, %v113
    %v130 = vcombine.high %v120, %v120
    %v131 = vcombine.high %v127, %v127
    %v140 = vmul.f32 %v38, %v106
    %v141 = vmul.f32 %v39, %v120
    %v142 = vmul.f32 %v40, %v128
    %v143 = vmul.f32 %v41, %v130
    %v144 = vmul.f32 %v42, %v113
    %v145 = vmul.f32 %v43, %v127
    %v146 = vmul.f32 %v44, %v129
    %v147 = vmul.f32 %v45, %v131
    %v148 = vlaneseq
    %vm149 = vcmp.ge.s32.totalorder %v148, 0
    %vm150 = vcmp.lt.s32.totalorder %v148, 512
    %vm151 = vmand %vm149, %vm150
    %152 = vst.msk [vmem:[#allocation7] sm:$0xf] %vm151, %v140
    %153 = vst.msk [vmem:[#allocation7 + $0x4] sm:$0xf] %vm151, %v141
    %154 = vst.msk [vmem:[#allocation7 + $0x8] sm:$0xf] %vm151, %v142
    %155 = vst.msk [vmem:[#allocation7 + $0xc] sm:$0xf] %vm151, %v143
    %156 = vst.msk [vmem:[#allocation7 + $0x10] sm:$0xf] %vm151, %v144
    %157 = vst.msk [vmem:[#allocation7 + $0x14] sm:$0xf] %vm151, %v145
    %158 = vst.msk [vmem:[#allocation7 + $0x18] sm:$0xf] %vm151, %v146
    %159 = vst.msk [vmem:[#allocation7 + $0x1c] sm:$0xf] %vm151, %v147
    // Predicated region
    $region18: #{tpu_custom_call.1} parent=1 // pred_check
      _
    $region19: #{tpu_custom_call.1} parent=1 // pred_check_branch
      %161 = sbr.rel (0) target = $region21
    $region20: #{tpu_custom_call.1} parent=1 // pred_region
      %s163 = ssub.s32 512, 64
      %164 = vsyncadd [#allocation4], %s163
      %s165 = sshll.u32 [#allocation7], 4
      %s166 = int_to_ptr.vmem [resolvable:$true] %s165
      %171 = dma.vmem_to_hbm [thread:$0]  %s166, 64, %s2, [#allocation4], 64, 64, 4
    $region21: #{tpu_custom_call.1} parent=1 // pred_fallthru
      _
    // Predicated region
    $region22: #{tpu_custom_call.1} parent=1 // pred_check
      _
    $region23: #{tpu_custom_call.1} parent=1 // pred_check_branch
      %173 = sbr.rel (0) target = $region25
    $region24: #{tpu_custom_call.1} parent=1 // pred_region
      %174 = dma.done [#allocation4], 512
    $region25: #{tpu_custom_call.1} parent=1 // pred_fallthru
      _
    %175 = vsyncpa [#allocation3], 1
    %176 = vsyncpa [#allocation6], 1
    %177 = vsyncpa [#allocation4], 1

</llo_original>
